<compile_context>
chip_gen: v6e
topology: v6e:2x2x1
jax: 0.10.0
libtpu: 0.0.40
codegen_flags: <defaults>
</compile_context>

<pallas_src>
import numpy as np
import jax
import jax.numpy as jnp
from jax.experimental import pallas as pl
from jax.experimental.pallas import tpu as pltpu

# ---------------- static (synthetic, deterministic) UHCI structure ----------------
LEAVES = (0, 1, 2, 3)                              # leaf node ids
# explicit ordered (node, children) pairs, topological bottom-up (no dict-order reliance)
HIERARCHY = ((4, (0, 1)), (5, (2, 3)), (6, (4, 5)))
ROOT = 6
N_LEAVES = len(LEAVES)
NB_SIGMOIDS = 128                                  # nb_sigmoids kwarg of UHCI
N_AGG = len(HIERARCHY)
MAX_K = max(len(c) for _, c in HIERARCHY)
MAX_PAIRS = max(len(c) * (len(c) - 1) // 2 for _, c in HIERARCHY)
OFF_MIN = N_AGG * MAX_K                            # offset of min-pair weights in the flat vector
OFF_MAX = OFF_MIN + N_AGG * MAX_PAIRS              # offset of max-pair weights
OFF_UC = OFF_MAX + N_AGG * MAX_PAIRS               # offset of per-leaf constants 0.5*sum_k p[i,k]
N_SCALARS = OFF_UC + N_LEAVES                      # total SMEM scalars (=16)

# TODO(synk): only forward() is implemented; winter_value_single_node / winter_values
# (Shapley/Winter explanation recursions over the tree) have no hot-path kernel and are omitted.


def _device_kind():
    try:
        return jax.devices()[0].device_kind.lower()
    except Exception:
        return ""


def _is_dual_tensorcore(kind):
    # v7x has 2 TensorCores per chip; everything else we target here has 1.
    return ("v7" in kind) or ("tpu7" in kind)


# ---------------------------------- Pallas kernel ----------------------------------
def uhci_kernel(xt_ref, prm_ref, w_ref, o_ref):
    # xt_ref : (L, TB)       x transposed -> batch on lanes (lane-dense)
    # prm_ref: (S, 3L)       packed columns [ (eta/2)^T | b^T | (p/2)^T ]
    # w_ref  : (N_SCALARS,)  flat SMEM: singles | mins | maxes | per-leaf utility constants
    # o_ref  : (1, TB)       lane-dense output row for this batch tile
    L = N_LEAVES
    vals = {}

    # --- marginal utilities: constant-folded sigmoid mixture ---
    #   u_i = sum_k (p_ik/2) * tanh((eta_ik/2) * (x_i - b_ik)) + 0.5*sum_k p_ik
    # inner (S, TB) block: 3 VPU ops + 1 EUP tanh per element, exact f32 sublane reduce.
    for li, leaf in enumerate(LEAVES):
        x_row = xt_ref[li:li + 1, :]                       # (1, TB)  lane-dense load
        eta_h = prm_ref[:, li:li + 1]                      # (S, 1)   0.5*eta
        b_c = prm_ref[:, L + li:L + li + 1]                # (S, 1)
        p_h = prm_ref[:, 2 * L + li:2 * L + li + 1]        # (S, 1)   0.5*p
        t = jnp.tanh(eta_h * (x_row - b_c))                # (S, TB)  single EUP op per vreg
        u = jnp.sum(p_h * t, axis=0, keepdims=True)        # (1, TB)
        vals[leaf] = u + w_ref[OFF_UC + li]                # + 0.5*sum_k p  (scalar broadcast)

    # --- hierarchical 2-additive Choquet integral, unrolled bottom-up (static tree) ---
    for ni, (node, children) in enumerate(HIERARCHY):
        k = len(children)
        cv = [vals[c] for c in children]                   # list of (1, TB) lane-dense vregs
        out = w_ref[ni * MAX_K + 0] * cv[0]
        for i in range(1, k):
            out = out + w_ref[ni * MAX_K + i] * cv[i]
        pidx = 0
        for i in range(k):
            for j in range(i + 1, k):
                out = out + w_ref[OFF_MIN + ni * MAX_PAIRS + pidx] * jnp.minimum(cv[i], cv[j])
                out = out + w_ref[OFF_MAX + ni * MAX_PAIRS + pidx] * jnp.maximum(cv[i], cv[j])
                pidx += 1
        vals[node] = out

    o_ref[...] = vals[ROOT]                                # root utility, (1, TB) unmasked store


def uhci_forward(x, eta, b, p, wsing, wmin, wmax, *, batch_tile=2048):
    """x: (B, L); eta/b/p: (L, S); wsing: (N_AGG, MAX_K); wmin/wmax: (N_AGG, MAX_PAIRS)."""
    B, L = x.shape
    S = eta.shape[1]
    kind = _device_kind()
    dual_tc = _is_dual_tensorcore(kind)

    # lane-dense batch tile: multiple of 128; small batches collapse to a single 128-wide step.
    tb = max(128, min(int(batch_tile), pl.cdiv(B, 128) * 128))
    tb = (tb // 128) * 128
    # on dual-TC chips make sure the grid has >=2 steps so both cores get work
    if dual_tc and pl.cdiv(B, tb) < 2 and tb >= 256:
        tb = max(128, ((tb // 2) // 128) * 128)
    B_pad = pl.cdiv(B, tb) * tb
    n_steps = B_pad // tb

    # packed, constant-folded parameters
    xt = jnp.zeros((L, B_pad), jnp.float32).at[:, :B].set(x.T.astype(jnp.float32))   # (L, B_pad)
    prm = jnp.concatenate(
        [0.5 * eta.T, b.T, 0.5 * p.T], axis=1).astype(jnp.float32)                   # (S, 3L)
    u_const = 0.5 * jnp.sum(p, axis=1)                                               # (L,)
    w_flat = jnp.concatenate(
        [jnp.ravel(wsing), jnp.ravel(wmin), jnp.ravel(wmax), u_const]
    ).astype(jnp.float32)                                                             # (N_SCALARS,)

    # v7x: actually split the batch axis across the two TensorCores; elsewhere "parallel".
    if dual_tc and n_steps >= 2:
        dim_sem = (pltpu.CORE_PARALLEL,)
    else:
        dim_sem = ("parallel",)

    out = pl.pallas_call(
        uhci_kernel,
        out_shape=jax.ShapeDtypeStruct((1, B_pad), jnp.float32),
        grid_spec=pltpu.PrefetchScalarGridSpec(
            num_scalar_prefetch=0,
            grid=(n_steps,),
            in_specs=[
                pl.BlockSpec((L, tb), lambda i: (0, i)),            # x^T tile (batch on lanes)
                pl.BlockSpec((S, 3 * L), lambda i: (0, 0)),         # packed eta/2, b, p/2 (replicated)
                pl.BlockSpec(memory_space=pltpu.MemorySpace.SMEM),  # flat Choquet weights + constants
            ],
            out_specs=pl.BlockSpec((1, tb), lambda i: (0, i)),      # lane-dense output row
        ),
        compiler_params=pltpu.CompilerParams(dimension_semantics=dim_sem),
    )(xt, prm, w_flat)
    return out[0, :B][:, None]                                      # (B, 1)


# ------------------------------ parameter construction ------------------------------
def init_params(key):
    k1, k2, k3, k4 = jax.random.split(key, 4)
    eta = jax.nn.softplus(jax.random.normal(k1, (N_LEAVES, NB_SIGMOIDS), jnp.float32))
    b = jax.random.normal(k2, (N_LEAVES, NB_SIGMOIDS), jnp.float32)
    p = jax.nn.softmax(jax.random.normal(k3, (N_LEAVES, NB_SIGMOIDS), jnp.float32), axis=-1)

    wsing = np.zeros((N_AGG, MAX_K), np.float32)
    wmin = np.zeros((N_AGG, MAX_PAIRS), np.float32)
    wmax = np.zeros((N_AGG, MAX_PAIRS), np.float32)
    node_keys = jax.random.split(k4, N_AGG)
    for ni, (node, children) in enumerate(HIERARCHY):
        k = len(children)
        npairs = k * (k - 1) // 2
        raw = jax.random.normal(node_keys[ni], (k + 2 * npairs,), jnp.float32)
        w = np.asarray(jax.nn.softmax(raw))          # nonneg, sums to 1 -> monotone CI
        wsing[ni, :k] = w[:k]
        wmin[ni, :npairs] = w[k:k + npairs]
        wmax[ni, :npairs] = w[k + npairs:]
    return eta, b, p, jnp.asarray(wsing), jnp.asarray(wmin), jnp.asarray(wmax)


# ------------------------------ pure-JAX reference (check) ------------------------------
def uhci_reference(x, eta, b, p, wsing, wmin, wmax):
    u = jnp.sum(p[None] * jax.nn.sigmoid(eta[None] * (x[:, :, None] - b[None])), axis=-1)  # (B, L)
    vals = {leaf: u[:, i] for i, leaf in enumerate(LEAVES)}
    for ni, (node, children) in enumerate(HIERARCHY):
        k = len(children)
        cv = [vals[c] for c in children]
        out = sum(wsing[ni, i] * cv[i] for i in range(k))
        pidx = 0
        for i in range(k):
            for j in range(i + 1, k):
                out = out + wmin[ni, pidx] * jnp.minimum(cv[i], cv[j])
                out = out + wmax[ni, pidx] * jnp.maximum(cv[i], cv[j])
                pidx += 1
        vals[node] = out
    return vals[ROOT][:, None]


if __name__ == "__main__":
    key = jax.random.PRNGKey(0)
    kx, kp = jax.random.split(key)
    B = 16
    x = jax.random.uniform(kx, (B, N_LEAVES), jnp.float32)      # leaf scores in [0, 1]
    eta, b, p, wsing, wmin, wmax = init_params(kp)

    out = uhci_forward(x, eta, b, p, wsing, wmin, wmax, batch_tile=2048)
    out = jax.block_until_ready(out)

    ref = jax.block_until_ready(uhci_reference(x, eta, b, p, wsing, wmin, wmax))
    np.testing.assert_allclose(np.asarray(out), np.asarray(ref), rtol=1e-4, atol=1e-4)

    print("KERNEL_OK")
</pallas_src>

<mosaic_0001>
module attributes {stable_mosaic.version = 11 : i64} {
  func.func @uhci_kernel(%arg0: i32, %arg1: memref<4x128xf32, #tpu.memory_space<vmem>>, %arg2: memref<128x12xf32, #tpu.memory_space<vmem>>, %arg3: memref<16xf32, #tpu.memory_space<smem>>, %arg4: memref<1x128xf32, #tpu.memory_space<vmem>>) attributes {dimension_semantics = [#tpu.dimension_semantics<parallel>], iteration_bounds = array<i64: 1>, scalar_prefetch = 0 : i64, scratch_operands = 0 : i64, tpu.core_type = #tpu.core_type<tc>, window_params = [{transform_indices = @transform_0, window_bounds = array<i64: 4, 128>}, {pipeline_mode = #tpu.pipeline_mode<synchronous>, transform_indices = @transform_1, window_bounds = array<i64: 128, 12>}, {transform_indices = @transform_2, window_bounds = array<i64: 16>}, {transform_indices = @transform_3, window_bounds = array<i64: 1, 128>}]} {
    %c0 = arith.constant 0 : index
    %c0_0 = arith.constant 0 : index
    %0 = vector.load %arg1[%c0, %c0_0] : memref<4x128xf32, #tpu.memory_space<vmem>>, vector<1x128xf32>
    %c0_1 = arith.constant 0 : index
    %c0_2 = arith.constant 0 : index
    %1 = vector.load %arg2[%c0_1, %c0_2] : memref<128x12xf32, #tpu.memory_space<vmem>>, vector<128x1xf32>
    %c0_3 = arith.constant 0 : index
    %c4 = arith.constant 4 : index
    %2 = vector.load %arg2[%c0_3, %c4] : memref<128x12xf32, #tpu.memory_space<vmem>>, vector<128x1xf32>
    %c0_4 = arith.constant 0 : index
    %c8 = arith.constant 8 : index
    %3 = vector.load %arg2[%c0_4, %c8] : memref<128x12xf32, #tpu.memory_space<vmem>>, vector<128x1xf32>
    %4 = vector.broadcast %0 : vector<1x128xf32> to vector<128x128xf32>
    %5 = vector.broadcast %2 : vector<128x1xf32> to vector<128x128xf32>
    %6 = arith.subf %4, %5 : vector<128x128xf32>
    %7 = vector.broadcast %1 : vector<128x1xf32> to vector<128x128xf32>
    %8 = arith.mulf %7, %6 : vector<128x128xf32>
    %9 = math.tanh %8 : vector<128x128xf32>
    %10 = vector.broadcast %3 : vector<128x1xf32> to vector<128x128xf32>
    %11 = arith.mulf %10, %9 : vector<128x128xf32>
    %cst = arith.constant dense<0.000000e+00> : vector<128xf32>
    %12 = vector.multi_reduction <add>, %11, %cst [0] : vector<128x128xf32> to vector<128xf32>
    %13 = vector.shape_cast %12 : vector<128xf32> to vector<1x128xf32>
    %c12 = arith.constant 12 : index
    %14 = memref.load %arg3[%c12] : memref<16xf32, #tpu.memory_space<smem>>
    %15 = vector.broadcast %14 : f32 to vector<1x128xf32>
    %16 = arith.addf %13, %15 : vector<1x128xf32>
    %c1 = arith.constant 1 : index
    %c0_5 = arith.constant 0 : index
    %17 = vector.load %arg1[%c1, %c0_5] : memref<4x128xf32, #tpu.memory_space<vmem>>, vector<1x128xf32>
    %c0_6 = arith.constant 0 : index
    %c1_7 = arith.constant 1 : index
    %18 = vector.load %arg2[%c0_6, %c1_7] : memref<128x12xf32, #tpu.memory_space<vmem>>, vector<128x1xf32>
    %c0_8 = arith.constant 0 : index
    %c5 = arith.constant 5 : index
    %19 = vector.load %arg2[%c0_8, %c5] : memref<128x12xf32, #tpu.memory_space<vmem>>, vector<128x1xf32>
    %c0_9 = arith.constant 0 : index
    %c9 = arith.constant 9 : index
    %20 = vector.load %arg2[%c0_9, %c9] : memref<128x12xf32, #tpu.memory_space<vmem>>, vector<128x1xf32>
    %21 = vector.broadcast %17 : vector<1x128xf32> to vector<128x128xf32>
    %22 = vector.broadcast %19 : vector<128x1xf32> to vector<128x128xf32>
    %23 = arith.subf %21, %22 : vector<128x128xf32>
    %24 = vector.broadcast %18 : vector<128x1xf32> to vector<128x128xf32>
    %25 = arith.mulf %24, %23 : vector<128x128xf32>
    %26 = math.tanh %25 : vector<128x128xf32>
    %27 = vector.broadcast %20 : vector<128x1xf32> to vector<128x128xf32>
    %28 = arith.mulf %27, %26 : vector<128x128xf32>
    %cst_10 = arith.constant dense<0.000000e+00> : vector<128xf32>
    %29 = vector.multi_reduction <add>, %28, %cst_10 [0] : vector<128x128xf32> to vector<128xf32>
    %30 = vector.shape_cast %29 : vector<128xf32> to vector<1x128xf32>
    %c13 = arith.constant 13 : index
    %31 = memref.load %arg3[%c13] : memref<16xf32, #tpu.memory_space<smem>>
    %32 = vector.broadcast %31 : f32 to vector<1x128xf32>
    %33 = arith.addf %30, %32 : vector<1x128xf32>
    %c2 = arith.constant 2 : index
    %c0_11 = arith.constant 0 : index
    %34 = vector.load %arg1[%c2, %c0_11] : memref<4x128xf32, #tpu.memory_space<vmem>>, vector<1x128xf32>
    %c0_12 = arith.constant 0 : index
    %c2_13 = arith.constant 2 : index
    %35 = vector.load %arg2[%c0_12, %c2_13] : memref<128x12xf32, #tpu.memory_space<vmem>>, vector<128x1xf32>
    %c0_14 = arith.constant 0 : index
    %c6 = arith.constant 6 : index
    %36 = vector.load %arg2[%c0_14, %c6] : memref<128x12xf32, #tpu.memory_space<vmem>>, vector<128x1xf32>
    %c0_15 = arith.constant 0 : index
    %c10 = arith.constant 10 : index
    %37 = vector.load %arg2[%c0_15, %c10] : memref<128x12xf32, #tpu.memory_space<vmem>>, vector<128x1xf32>
    %38 = vector.broadcast %34 : vector<1x128xf32> to vector<128x128xf32>
    %39 = vector.broadcast %36 : vector<128x1xf32> to vector<128x128xf32>
    %40 = arith.subf %38, %39 : vector<128x128xf32>
    %41 = vector.broadcast %35 : vector<128x1xf32> to vector<128x128xf32>
    %42 = arith.mulf %41, %40 : vector<128x128xf32>
    %43 = math.tanh %42 : vector<128x128xf32>
    %44 = vector.broadcast %37 : vector<128x1xf32> to vector<128x128xf32>
    %45 = arith.mulf %44, %43 : vector<128x128xf32>
    %cst_16 = arith.constant dense<0.000000e+00> : vector<128xf32>
    %46 = vector.multi_reduction <add>, %45, %cst_16 [0] : vector<128x128xf32> to vector<128xf32>
    %47 = vector.shape_cast %46 : vector<128xf32> to vector<1x128xf32>
    %c14 = arith.constant 14 : index
    %48 = memref.load %arg3[%c14] : memref<16xf32, #tpu.memory_space<smem>>
    %49 = vector.broadcast %48 : f32 to vector<1x128xf32>
    %50 = arith.addf %47, %49 : vector<1x128xf32>
    %c3 = arith.constant 3 : index
    %c0_17 = arith.constant 0 : index
    %51 = vector.load %arg1[%c3, %c0_17] : memref<4x128xf32, #tpu.memory_space<vmem>>, vector<1x128xf32>
    %c0_18 = arith.constant 0 : index
    %c3_19 = arith.constant 3 : index
    %52 = vector.load %arg2[%c0_18, %c3_19] : memref<128x12xf32, #tpu.memory_space<vmem>>, vector<128x1xf32>
    %c0_20 = arith.constant 0 : index
    %c7 = arith.constant 7 : index
    %53 = vector.load %arg2[%c0_20, %c7] : memref<128x12xf32, #tpu.memory_space<vmem>>, vector<128x1xf32>
    %c0_21 = arith.constant 0 : index
    %c11 = arith.constant 11 : index
    %54 = vector.load %arg2[%c0_21, %c11] : memref<128x12xf32, #tpu.memory_space<vmem>>, vector<128x1xf32>
    %55 = vector.broadcast %51 : vector<1x128xf32> to vector<128x128xf32>
    %56 = vector.broadcast %53 : vector<128x1xf32> to vector<128x128xf32>
    %57 = arith.subf %55, %56 : vector<128x128xf32>
    %58 = vector.broadcast %52 : vector<128x1xf32> to vector<128x128xf32>
    %59 = arith.mulf %58, %57 : vector<128x128xf32>
    %60 = math.tanh %59 : vector<128x128xf32>
    %61 = vector.broadcast %54 : vector<128x1xf32> to vector<128x128xf32>
    %62 = arith.mulf %61, %60 : vector<128x128xf32>
    %cst_22 = arith.constant dense<0.000000e+00> : vector<128xf32>
    %63 = vector.multi_reduction <add>, %62, %cst_22 [0] : vector<128x128xf32> to vector<128xf32>
    %64 = vector.shape_cast %63 : vector<128xf32> to vector<1x128xf32>
    %c15 = arith.constant 15 : index
    %65 = memref.load %arg3[%c15] : memref<16xf32, #tpu.memory_space<smem>>
    %66 = vector.broadcast %65 : f32 to vector<1x128xf32>
    %67 = arith.addf %64, %66 : vector<1x128xf32>
    %c0_23 = arith.constant 0 : index
    %68 = memref.load %arg3[%c0_23] : memref<16xf32, #tpu.memory_space<smem>>
    %69 = vector.broadcast %68 : f32 to vector<1x128xf32>
    %70 = arith.mulf %69, %16 : vector<1x128xf32>
    %c1_24 = arith.constant 1 : index
    %71 = memref.load %arg3[%c1_24] : memref<16xf32, #tpu.memory_space<smem>>
    %72 = vector.broadcast %71 : f32 to vector<1x128xf32>
    %73 = arith.mulf %72, %33 : vector<1x128xf32>
    %74 = arith.addf %70, %73 : vector<1x128xf32>
    %c6_25 = arith.constant 6 : index
    %75 = memref.load %arg3[%c6_25] : memref<16xf32, #tpu.memory_space<smem>>
    %76 = arith.minimumf %16, %33 : vector<1x128xf32>
    %77 = vector.broadcast %75 : f32 to vector<1x128xf32>
    %78 = arith.mulf %77, %76 : vector<1x128xf32>
    %79 = arith.addf %74, %78 : vector<1x128xf32>
    %c9_26 = arith.constant 9 : index
    %80 = memref.load %arg3[%c9_26] : memref<16xf32, #tpu.memory_space<smem>>
    %81 = arith.maximumf %16, %33 : vector<1x128xf32>
    %82 = vector.broadcast %80 : f32 to vector<1x128xf32>
    %83 = arith.mulf %82, %81 : vector<1x128xf32>
    %84 = arith.addf %79, %83 : vector<1x128xf32>
    %c2_27 = arith.constant 2 : index
    %85 = memref.load %arg3[%c2_27] : memref<16xf32, #tpu.memory_space<smem>>
    %86 = vector.broadcast %85 : f32 to vector<1x128xf32>
    %87 = arith.mulf %86, %50 : vector<1x128xf32>
    %c3_28 = arith.constant 3 : index
    %88 = memref.load %arg3[%c3_28] : memref<16xf32, #tpu.memory_space<smem>>
    %89 = vector.broadcast %88 : f32 to vector<1x128xf32>
    %90 = arith.mulf %89, %67 : vector<1x128xf32>
    %91 = arith.addf %87, %90 : vector<1x128xf32>
    %c7_29 = arith.constant 7 : index
    %92 = memref.load %arg3[%c7_29] : memref<16xf32, #tpu.memory_space<smem>>
    %93 = arith.minimumf %50, %67 : vector<1x128xf32>
    %94 = vector.broadcast %92 : f32 to vector<1x128xf32>
    %95 = arith.mulf %94, %93 : vector<1x128xf32>
    %96 = arith.addf %91, %95 : vector<1x128xf32>
    %c10_30 = arith.constant 10 : index
    %97 = memref.load %arg3[%c10_30] : memref<16xf32, #tpu.memory_space<smem>>
    %98 = arith.maximumf %50, %67 : vector<1x128xf32>
    %99 = vector.broadcast %97 : f32 to vector<1x128xf32>
    %100 = arith.mulf %99, %98 : vector<1x128xf32>
    %101 = arith.addf %96, %100 : vector<1x128xf32>
    %c4_31 = arith.constant 4 : index
    %102 = memref.load %arg3[%c4_31] : memref<16xf32, #tpu.memory_space<smem>>
    %103 = vector.broadcast %102 : f32 to vector<1x128xf32>
    %104 = arith.mulf %103, %84 : vector<1x128xf32>
    %c5_32 = arith.constant 5 : index
    %105 = memref.load %arg3[%c5_32] : memref<16xf32, #tpu.memory_space<smem>>
    %106 = vector.broadcast %105 : f32 to vector<1x128xf32>
    %107 = arith.mulf %106, %101 : vector<1x128xf32>
    %108 = arith.addf %104, %107 : vector<1x128xf32>
    %c8_33 = arith.constant 8 : index
    %109 = memref.load %arg3[%c8_33] : memref<16xf32, #tpu.memory_space<smem>>
    %110 = arith.minimumf %84, %101 : vector<1x128xf32>
    %111 = vector.broadcast %109 : f32 to vector<1x128xf32>
    %112 = arith.mulf %111, %110 : vector<1x128xf32>
    %113 = arith.addf %108, %112 : vector<1x128xf32>
    %c11_34 = arith.constant 11 : index
    %114 = memref.load %arg3[%c11_34] : memref<16xf32, #tpu.memory_space<smem>>
    %115 = arith.maximumf %84, %101 : vector<1x128xf32>
    %116 = vector.broadcast %114 : f32 to vector<1x128xf32>
    %117 = arith.mulf %116, %115 : vector<1x128xf32>
    %118 = arith.addf %113, %117 : vector<1x128xf32>
    %c0_35 = arith.constant 0 : index
    %c0_36 = arith.constant 0 : index
    %119 = vector.load %arg4[%c0_35, %c0_36] : memref<1x128xf32, #tpu.memory_space<vmem>>, vector<1x128xf32>
    tpu.vector_store %arg4[%c0_35, %c0_36], %118 {strides = array<i32>} : memref<1x128xf32, #tpu.memory_space<vmem>>, vector<1x128xf32>,
    return
  }
  func.func @transform_0(%arg0: i32) -> (i32, i32) {
    %c0_i32 = arith.constant 0 : i32
    %c0_i32_0 = arith.constant 0 : i32
    return %c0_i32, %arg0 : i32, i32
  }
  func.func @transform_1(%arg0: i32) -> (i32, i32) {
    %c0_i32 = arith.constant 0 : i32
    %c0_i32_0 = arith.constant 0 : i32
    %c0_i32_1 = arith.constant 0 : i32
    return %c0_i32, %c0_i32_0 : i32, i32
  }
  func.func @transform_2(%arg0: i32) -> i32 {
    %c0_i32 = arith.constant 0 : i32
    %c0_i32_0 = arith.constant 0 : i32
    return %c0_i32 : i32
  }
  func.func @transform_3(%arg0: i32) -> (i32, i32) {
    %c0_i32 = arith.constant 0 : i32
    %c0_i32_0 = arith.constant 0 : i32
    return %c0_i32, %arg0 : i32, i32
  }
}

</mosaic_0001>

<llo_original>
// kernel: tpu_custom_call.1
$region0: #{tpu_custom_call.1}
  #allocation0 [shape = 'u32[]', space=smem, size = 0x4, offset = 0x4, fixed_abs, tag = 'smem constant byte address 0x4 - core index']
  #allocation1 [shape = 'u32[144,128]{1,0:T(1,128)}', space=vmem, size = 0x12000, scoped, tag = 'internal scratch']
  %s0 = inlined_call_operand.vmem [shape: f32[4,128], index: 0, kind: input, shape index: {}]
  %s1 = inlined_call_operand.vmem [shape: f32[128,12], index: 1, kind: input, shape index: {}]
  %s2 = inlined_call_operand.vmem [shape: f32[16], index: 2, kind: input, shape index: {}]
  %s3 = inlined_call_operand.hbm [shape: f32[1,128], index: 3, kind: output, shape index: {}]
  %s4 = sld [smem:[#allocation0]]
  $region26: #{tpu_custom_call.1} parent=0
    _
  %s6 = ssub.s32 1, %s4
  %s7 = scalar_select 0, %s6, %s4
  $region1: #{tpu_custom_call.1} parent=0
    #allocation2 [shape = 'u8[512]{0}', space=smem, size = 0x200, scoped, tag = 'input window, operand 2, single buffered']
    #allocation3 [shape = 's32[1]{0}', space=sflag, size = 0x4, scoped, tag = 'scoped memory for tpu_custom_call.1']
    #allocation4 [shape = 's32[1]{0}', space=sflag, size = 0x4, scoped, tag = 'scoped memory for tpu_custom_call.1']
    #allocation5 [shape = 'u8[512]{0}', space=vmem, size = 0x400, scoped, tag = 'output window, operand 0, single buffered']
    %8 = vsyncpa [#allocation4], 0
    %9 = vsyncpa [#allocation3], 0
    // Predicated region
    $region2: #{tpu_custom_call.1} parent=1 // pred_check
      _
    $region3: #{tpu_custom_call.1} parent=1 // pred_check_branch
      %11 = sbr.rel (0) target = $region5
    $region4: #{tpu_custom_call.1} parent=1 // pred_region
      _
    $region5: #{tpu_custom_call.1} parent=1 // pred_fallthru
      _
    // Predicated region
    $region6: #{tpu_custom_call.1} parent=1 // pred_check
      _
    $region7: #{tpu_custom_call.1} parent=1 // pred_check_branch
      %13 = sbr.rel (0) target = $region9
    $region8: #{tpu_custom_call.1} parent=1 // pred_region
      _
    $region9: #{tpu_custom_call.1} parent=1 // pred_fallthru
      _
    // Predicated region
    $region10: #{tpu_custom_call.1} parent=1 // pred_check
      _
    $region11: #{tpu_custom_call.1} parent=1 // pred_check_branch
      %15 = sbr.rel (0) target = $region13
    $region12: #{tpu_custom_call.1} parent=1 // pred_region
      %s17 = ssub.s32 16, 16
      %18 = vsyncadd [#allocation4], %s17
      %s20 = sshll.u32 %s2, 4
      %s21 = int_to_ptr.vmem [resolvable:$true] %s20
      %23 = dma.vmem_to_smem %s21, 16, [#allocation2], [#allocation4]
    $region13: #{tpu_custom_call.1} parent=1 // pred_fallthru
      _
    // Predicated region
    $region14: #{tpu_custom_call.1} parent=1 // pred_check
      _
    $region15: #{tpu_custom_call.1} parent=1 // pred_check_branch
      %25 = sbr.rel (0) target = $region17
    $region16: #{tpu_custom_call.1} parent=1 // pred_region
      %26 = dma.done [#allocation4], 16
    $region17: #{tpu_custom_call.1} parent=1 // pred_fallthru
      _
    %27 = sfence
    %v28 = vld [vmem:[%s0] sm:$0x1]
    %v29 = vld [vmem:[%s1] sm:$0xff]
    %v30 = vld [vmem:[%s1 + $0x8] sm:$0xff]
    %v31 = vld [vmem:[%s1 + $0x10] sm:$0xff]
    %v32 = vld [vmem:[%s1 + $0x18] sm:$0xff]
    %v33 = vld [vmem:[%s1 + $0x20] sm:$0xff]
    %v34 = vld [vmem:[%s1 + $0x28] sm:$0xff]
    %v35 = vld [vmem:[%s1 + $0x30] sm:$0xff]
    %v36 = vld [vmem:[%s1 + $0x38] sm:$0xff]
    %v37 = vld [vmem:[%s1 + $0x40] sm:$0xff]
    %v38 = vld [vmem:[%s1 + $0x48] sm:$0xff]
    %v39 = vld [vmem:[%s1 + $0x50] sm:$0xff]
    %v40 = vld [vmem:[%s1 + $0x58] sm:$0xff]
    %v41 = vld [vmem:[%s1 + $0x60] sm:$0xff]
    %v42 = vld [vmem:[%s1 + $0x68] sm:$0xff]
    %v43 = vld [vmem:[%s1 + $0x70] sm:$0xff]
    %v44 = vld [vmem:[%s1 + $0x78] sm:$0xff]
    %v45 = vlaneseq
    %v46 = vshrl.u32 %v45, 7
    %v47 = vsub.s32 0, %v46
    %v48 = vrot.slane %v28, %v47
    %50 = vset.pattern.permute.xlu0 4
    %51 = vperm.xlu0 %50, %v29
    %v52 = vpop.permute.xlu0 %51
    %55 = vset.pattern.permute.xlu0 4
    %56 = vperm.xlu0 %55, %v30
    %v57 = vpop.permute.xlu0 %56
    %60 = vset.pattern.permute.xlu0 4
    %61 = vperm.xlu0 %60, %v31
    %v62 = vpop.permute.xlu0 %61
    %65 = vset.pattern.permute.xlu0 4
    %66 = vperm.xlu0 %65, %v32
    %v67 = vpop.permute.xlu0 %66
    %70 = vset.pattern.permute.xlu0 4
    %71 = vperm.xlu0 %70, %v33
    %v72 = vpop.permute.xlu0 %71
    %75 = vset.pattern.permute.xlu0 4
    %76 = vperm.xlu0 %75, %v34
    %v77 = vpop.permute.xlu0 %76
    %80 = vset.pattern.permute.xlu0 4
    %81 = vperm.xlu0 %80, %v35
    %v82 = vpop.permute.xlu0 %81
    %85 = vset.pattern.permute.xlu0 4
    %86 = vperm.xlu0 %85, %v36
    %v87 = vpop.permute.xlu0 %86
    %90 = vset.pattern.permute.xlu0 4
    %91 = vperm.xlu0 %90, %v37
    %v92 = vpop.permute.xlu0 %91
    %95 = vset.pattern.permute.xlu0 4
    %96 = vperm.xlu0 %95, %v38
    %v97 = vpop.permute.xlu0 %96
    %100 = vset.pattern.permute.xlu0 4
    %101 = vperm.xlu0 %100, %v39
    %v102 = vpop.permute.xlu0 %101
    %105 = vset.pattern.permute.xlu0 4
    %106 = vperm.xlu0 %105, %v40
    %v107 = vpop.permute.xlu0 %106
    %110 = vset.pattern.permute.xlu0 4
    %111 = vperm.xlu0 %110, %v41
    %v112 = vpop.permute.xlu0 %111
    %115 = vset.pattern.permute.xlu0 4
    %116 = vperm.xlu0 %115, %v42
    %v117 = vpop.permute.xlu0 %116
    %120 = vset.pattern.permute.xlu0 4
    %121 = vperm.xlu0 %120, %v43
    %v122 = vpop.permute.xlu0 %121
    %125 = vset.pattern.permute.xlu0 4
    %126 = vperm.xlu0 %125, %v44
    %v127 = vpop.permute.xlu0 %126
    %v129 = vsub.f32 %v48, %v52
    %v130 = vsub.f32 %v48, %v57
    %v131 = vsub.f32 %v48, %v62
    %v132 = vsub.f32 %v48, %v67
    %v133 = vsub.f32 %v48, %v72
    %v134 = vsub.f32 %v48, %v77
    %v135 = vsub.f32 %v48, %v82
    %v136 = vsub.f32 %v48, %v87
    %v137 = vsub.f32 %v48, %v92
    %v138 = vsub.f32 %v48, %v97
    %v139 = vsub.f32 %v48, %v102
    %v140 = vsub.f32 %v48, %v107
    %v141 = vsub.f32 %v48, %v112
    %v142 = vsub.f32 %v48, %v117
    %v143 = vsub.f32 %v48, %v122
    %v144 = vsub.f32 %v48, %v127
    %145 = vset.pattern.permute.xlu0 0
    %146 = vperm.xlu0 %145, %v29
    %v147 = vpop.permute.xlu0 %146
    %149 = vset.pattern.permute.xlu0 0
    %150 = vperm.xlu0 %149, %v30
    %v151 = vpop.permute.xlu0 %150
    %153 = vset.pattern.permute.xlu0 0
    %154 = vperm.xlu0 %153, %v31
    %v155 = vpop.permute.xlu0 %154
    %157 = vset.pattern.permute.xlu0 0
    %158 = vperm.xlu0 %157, %v32
    %v159 = vpop.permute.xlu0 %158
    %161 = vset.pattern.permute.xlu0 0
    %162 = vperm.xlu0 %161, %v33
    %v163 = vpop.permute.xlu0 %162
    %165 = vset.pattern.permute.xlu0 0
    %166 = vperm.xlu0 %165, %v34
    %v167 = vpop.permute.xlu0 %166
    %169 = vset.pattern.permute.xlu0 0
    %170 = vperm.xlu0 %169, %v35
    %v171 = vpop.permute.xlu0 %170
    %173 = vset.pattern.permute.xlu0 0
    %174 = vperm.xlu0 %173, %v36
    %v175 = vpop.permute.xlu0 %174
    %177 = vset.pattern.permute.xlu0 0
    %178 = vperm.xlu0 %177, %v37
    %v179 = vpop.permute.xlu0 %178
    %181 = vset.pattern.permute.xlu0 0
    %182 = vperm.xlu0 %181, %v38
    %v183 = vpop.permute.xlu0 %182
    %185 = vset.pattern.permute.xlu0 0
    %186 = vperm.xlu0 %185, %v39
    %v187 = vpop.permute.xlu0 %186
    %189 = vset.pattern.permute.xlu0 0
    %190 = vperm.xlu0 %189, %v40
    %v191 = vpop.permute.xlu0 %190
    %193 = vset.pattern.permute.xlu0 0
    %194 = vperm.xlu0 %193, %v41
    %v195 = vpop.permute.xlu0 %194
    %197 = vset.pattern.permute.xlu0 0
    %198 = vperm.xlu0 %197, %v42
    %v199 = vpop.permute.xlu0 %198
    %201 = vset.pattern.permute.xlu0 0
    %202 = vperm.xlu0 %201, %v43
    %v203 = vpop.permute.xlu0 %202
    %205 = vset.pattern.permute.xlu0 0
    %206 = vperm.xlu0 %205, %v44
    %v207 = vpop.permute.xlu0 %206
    %v209 = vmul.f32 %v147, %v129
    %v210 = vmul.f32 %v151, %v130
    %v211 = vmul.f32 %v155, %v131
    %v212 = vmul.f32 %v159, %v132
    %v213 = vmul.f32 %v163, %v133
    %v214 = vmul.f32 %v167, %v134
    %v215 = vmul.f32 %v171, %v135
    %v216 = vmul.f32 %v175, %v136
    %v217 = vmul.f32 %v179, %v137
    %v218 = vmul.f32 %v183, %v138
    %v219 = vmul.f32 %v187, %v139
    %v220 = vmul.f32 %v191, %v140
    %v221 = vmul.f32 %v195, %v141
    %v222 = vmul.f32 %v199, %v142
    %v223 = vmul.f32 %v203, %v143
    %v224 = vmul.f32 %v207, %v144
    %v225 = vtanh.pop %v209
    %v226 = vtanh.pop %v210
    %v227 = vtanh.pop %v211
    %v228 = vtanh.pop %v212
    %v229 = vtanh.pop %v213
    %v230 = vtanh.pop %v214
    %v231 = vtanh.pop %v215
    %v232 = vtanh.pop %v216
    %v233 = vtanh.pop %v217
    %v234 = vtanh.pop %v218
    %v235 = vtanh.pop %v219
    %v236 = vtanh.pop %v220
    %v237 = vtanh.pop %v221
    %v238 = vtanh.pop %v222
    %v239 = vtanh.pop %v223
    %v240 = vtanh.pop %v224
    %241 = vset.pattern.permute.xlu0 8
    %242 = vperm.xlu0 %241, %v29
    %v243 = vpop.permute.xlu0 %242
    %245 = vset.pattern.permute.xlu0 8
    %246 = vperm.xlu0 %245, %v30
    %v247 = vpop.permute.xlu0 %246
    %249 = vset.pattern.permute.xlu0 8
    %250 = vperm.xlu0 %249, %v31
    %v251 = vpop.permute.xlu0 %250
    %253 = vset.pattern.permute.xlu0 8
    %254 = vperm.xlu0 %253, %v32
    %v255 = vpop.permute.xlu0 %254
    %257 = vset.pattern.permute.xlu0 8
    %258 = vperm.xlu0 %257, %v33
    %v259 = vpop.permute.xlu0 %258
    %261 = vset.pattern.permute.xlu0 8
    %262 = vperm.xlu0 %261, %v34
    %v263 = vpop.permute.xlu0 %262
    %265 = vset.pattern.permute.xlu0 8
    %266 = vperm.xlu0 %265, %v35
    %v267 = vpop.permute.xlu0 %266
    %269 = vset.pattern.permute.xlu0 8
    %270 = vperm.xlu0 %269, %v36
    %v271 = vpop.permute.xlu0 %270
    %273 = vset.pattern.permute.xlu0 8
    %274 = vperm.xlu0 %273, %v37
    %v275 = vpop.permute.xlu0 %274
    %277 = vset.pattern.permute.xlu0 8
    %278 = vperm.xlu0 %277, %v38
    %v279 = vpop.permute.xlu0 %278
    %281 = vset.pattern.permute.xlu0 8
    %282 = vperm.xlu0 %281, %v39
    %v283 = vpop.permute.xlu0 %282
    %285 = vset.pattern.permute.xlu0 8
    %286 = vperm.xlu0 %285, %v40
    %v287 = vpop.permute.xlu0 %286
    %289 = vset.pattern.permute.xlu0 8
    %290 = vperm.xlu0 %289, %v41
    %v291 = vpop.permute.xlu0 %290
    %293 = vset.pattern.permute.xlu0 8
    %294 = vperm.xlu0 %293, %v42
    %v295 = vpop.permute.xlu0 %294
    %297 = vset.pattern.permute.xlu0 8
    %298 = vperm.xlu0 %297, %v43
    %v299 = vpop.permute.xlu0 %298
    %301 = vset.pattern.permute.xlu0 8
    %302 = vperm.xlu0 %301, %v44
    %v303 = vpop.permute.xlu0 %302
    %v305 = vmul.f32 %v243, %v225
    %v306 = vmul.f32 %v247, %v226
    %v307 = vmul.f32 %v251, %v227
    %v308 = vmul.f32 %v255, %v228
    %v309 = vmul.f32 %v259, %v229
    %v310 = vmul.f32 %v263, %v230
    %v311 = vmul.f32 %v267, %v231
    %v312 = vmul.f32 %v271, %v232
    %v313 = vmul.f32 %v275, %v233
    %v314 = vmul.f32 %v279, %v234
    %v315 = vmul.f32 %v283, %v235
    %v316 = vmul.f32 %v287, %v236
    %v317 = vmul.f32 %v291, %v237
    %v318 = vmul.f32 %v295, %v238
    %v319 = vmul.f32 %v299, %v239
    %v320 = vmul.f32 %v303, %v240
    %v321 = vadd.f32 %v305, %v306
    %v322 = vadd.f32 %v321, %v307
    %v323 = vadd.f32 %v322, %v308
    %v324 = vadd.f32 %v323, %v309
    %v325 = vadd.f32 %v324, %v310
    %v326 = vadd.f32 %v325, %v311
    %v327 = vadd.f32 %v326, %v312
    %v328 = vadd.f32 %v327, %v313
    %v329 = vadd.f32 %v328, %v314
    %v330 = vadd.f32 %v329, %v315
    %v331 = vadd.f32 %v330, %v316
    %v332 = vadd.f32 %v331, %v317
    %v333 = vadd.f32 %v332, %v318
    %v334 = vadd.f32 %v333, %v319
    %v335 = vadd.f32 %v334, %v320
    %v336 = vrot.slane %v335, 4
    %v337 = vadd.f32 %v335, %v336
    %v338 = vrot.slane %v337, 2
    %v339 = vadd.f32 %v337, %v338
    %v340 = vrot.slane %v339, 1
    %v341 = vadd.f32 %v339, %v340
    %s342 = sld [smem:[#allocation2 + $0xc]]
    %v343 = vstv %s342
    %v344 = vadd.f32 %v341, %v343
    %v345 = vld [vmem:[%s0 + $0x1] sm:$0x1]
    %v346 = vlaneseq
    %v347 = vshrl.u32 %v346, 7
    %v348 = vsub.s32 0, %v347
    %v349 = vrot.slane %v345, %v348
    %350 = vset.pattern.permute.xlu0 5
    %351 = vperm.xlu0 %350, %v29
    %v352 = vpop.permute.xlu0 %351
    %354 = vset.pattern.permute.xlu0 5
    %355 = vperm.xlu0 %354, %v30
    %v356 = vpop.permute.xlu0 %355
    %358 = vset.pattern.permute.xlu0 5
    %359 = vperm.xlu0 %358, %v31
    %v360 = vpop.permute.xlu0 %359
    %362 = vset.pattern.permute.xlu0 5
    %363 = vperm.xlu0 %362, %v32
    %v364 = vpop.permute.xlu0 %363
    %366 = vset.pattern.permute.xlu0 5
    %367 = vperm.xlu0 %366, %v33
    %v368 = vpop.permute.xlu0 %367
    %370 = vset.pattern.permute.xlu0 5
    %371 = vperm.xlu0 %370, %v34
    %v372 = vpop.permute.xlu0 %371
    %374 = vset.pattern.permute.xlu0 5
    %375 = vperm.xlu0 %374, %v35
    %v376 = vpop.permute.xlu0 %375
    %378 = vset.pattern.permute.xlu0 5
    %379 = vperm.xlu0 %378, %v36
    %v380 = vpop.permute.xlu0 %379
    %382 = vset.pattern.permute.xlu0 5
    %383 = vperm.xlu0 %382, %v37
    %v384 = vpop.permute.xlu0 %383
    %386 = vset.pattern.permute.xlu0 5
    %387 = vperm.xlu0 %386, %v38
    %v388 = vpop.permute.xlu0 %387
    %390 = vset.pattern.permute.xlu0 5
    %391 = vperm.xlu0 %390, %v39
    %v392 = vpop.permute.xlu0 %391
    %394 = vset.pattern.permute.xlu0 5
    %395 = vperm.xlu0 %394, %v40
    %v396 = vpop.permute.xlu0 %395
    %398 = vset.pattern.permute.xlu0 5
    %399 = vperm.xlu0 %398, %v41
    %v400 = vpop.permute.xlu0 %399
    %402 = vset.pattern.permute.xlu0 5
    %403 = vperm.xlu0 %402, %v42
    %v404 = vpop.permute.xlu0 %403
    %406 = vset.pattern.permute.xlu0 5
    %407 = vperm.xlu0 %406, %v43
    %v408 = vpop.permute.xlu0 %407
    %410 = vset.pattern.permute.xlu0 5
    %411 = vperm.xlu0 %410, %v44
    %v412 = vpop.permute.xlu0 %411
    %v414 = vsub.f32 %v349, %v352
    %v415 = vsub.f32 %v349, %v356
    %v416 = vsub.f32 %v349, %v360
    %v417 = vsub.f32 %v349, %v364
    %v418 = vsub.f32 %v349, %v368
    %v419 = vsub.f32 %v349, %v372
    %v420 = vsub.f32 %v349, %v376
    %v421 = vsub.f32 %v349, %v380
    %v422 = vsub.f32 %v349, %v384
    %v423 = vsub.f32 %v349, %v388
    %v424 = vsub.f32 %v349, %v392
    %v425 = vsub.f32 %v349, %v396
    %v426 = vsub.f32 %v349, %v400
    %v427 = vsub.f32 %v349, %v404
    %v428 = vsub.f32 %v349, %v408
    %v429 = vsub.f32 %v349, %v412
    %430 = vset.pattern.permute.xlu0 1
    %431 = vperm.xlu0 %430, %v29
    %v432 = vpop.permute.xlu0 %431
    %434 = vset.pattern.permute.xlu0 1
    %435 = vperm.xlu0 %434, %v30
    %v436 = vpop.permute.xlu0 %435
    %438 = vset.pattern.permute.xlu0 1
    %439 = vperm.xlu0 %438, %v31
    %v440 = vpop.permute.xlu0 %439
    %442 = vset.pattern.permute.xlu0 1
    %443 = vperm.xlu0 %442, %v32
    %v444 = vpop.permute.xlu0 %443
    %446 = vset.pattern.permute.xlu0 1
    %447 = vperm.xlu0 %446, %v33
    %v448 = vpop.permute.xlu0 %447
    %450 = vset.pattern.permute.xlu0 1
    %451 = vperm.xlu0 %450, %v34
    %v452 = vpop.permute.xlu0 %451
    %454 = vset.pattern.permute.xlu0 1
    %455 = vperm.xlu0 %454, %v35
    %v456 = vpop.permute.xlu0 %455
    %458 = vset.pattern.permute.xlu0 1
    %459 = vperm.xlu0 %458, %v36
    %v460 = vpop.permute.xlu0 %459
    %462 = vset.pattern.permute.xlu0 1
    %463 = vperm.xlu0 %462, %v37
    %v464 = vpop.permute.xlu0 %463
    %466 = vset.pattern.permute.xlu0 1
    %467 = vperm.xlu0 %466, %v38
    %v468 = vpop.permute.xlu0 %467
    %470 = vset.pattern.permute.xlu0 1
    %471 = vperm.xlu0 %470, %v39
    %v472 = vpop.permute.xlu0 %471
    %474 = vset.pattern.permute.xlu0 1
    %475 = vperm.xlu0 %474, %v40
    %v476 = vpop.permute.xlu0 %475
    %478 = vset.pattern.permute.xlu0 1
    %479 = vperm.xlu0 %478, %v41
    %v480 = vpop.permute.xlu0 %479
    %482 = vset.pattern.permute.xlu0 1
    %483 = vperm.xlu0 %482, %v42
    %v484 = vpop.permute.xlu0 %483
    %486 = vset.pattern.permute.xlu0 1
    %487 = vperm.xlu0 %486, %v43
    %v488 = vpop.permute.xlu0 %487
    %490 = vset.pattern.permute.xlu0 1
    %491 = vperm.xlu0 %490, %v44
    %v492 = vpop.permute.xlu0 %491
    %v494 = vmul.f32 %v432, %v414
    %v495 = vmul.f32 %v436, %v415
    %v496 = vmul.f32 %v440, %v416
    %v497 = vmul.f32 %v444, %v417
    %v498 = vmul.f32 %v448, %v418
    %v499 = vmul.f32 %v452, %v419
    %v500 = vmul.f32 %v456, %v420
    %v501 = vmul.f32 %v460, %v421
    %v502 = vmul.f32 %v464, %v422
    %v503 = vmul.f32 %v468, %v423
    %v504 = vmul.f32 %v472, %v424
    %v505 = vmul.f32 %v476, %v425
    %v506 = vmul.f32 %v480, %v426
    %v507 = vmul.f32 %v484, %v427
    %v508 = vmul.f32 %v488, %v428
    %v509 = vmul.f32 %v492, %v429
    %v510 = vtanh.pop %v494
    %v511 = vtanh.pop %v495
    %v512 = vtanh.pop %v496
    %v513 = vtanh.pop %v497
    %v514 = vtanh.pop %v498
    %v515 = vtanh.pop %v499
    %v516 = vtanh.pop %v500
    %v517 = vtanh.pop %v501
    %v518 = vtanh.pop %v502
    %v519 = vtanh.pop %v503
    %v520 = vtanh.pop %v504
    %v521 = vtanh.pop %v505
    %v522 = vtanh.pop %v506
    %v523 = vtanh.pop %v507
    %v524 = vtanh.pop %v508
    %v525 = vtanh.pop %v509
    %526 = vset.pattern.permute.xlu0 9
    %527 = vperm.xlu0 %526, %v29
    %v528 = vpop.permute.xlu0 %527
    %530 = vset.pattern.permute.xlu0 9
    %531 = vperm.xlu0 %530, %v30
    %v532 = vpop.permute.xlu0 %531
    %534 = vset.pattern.permute.xlu0 9
    %535 = vperm.xlu0 %534, %v31
    %v536 = vpop.permute.xlu0 %535
    %538 = vset.pattern.permute.xlu0 9
    %539 = vperm.xlu0 %538, %v32
    %v540 = vpop.permute.xlu0 %539
    %542 = vset.pattern.permute.xlu0 9
    %543 = vperm.xlu0 %542, %v33
    %v544 = vpop.permute.xlu0 %543
    %546 = vset.pattern.permute.xlu0 9
    %547 = vperm.xlu0 %546, %v34
    %v548 = vpop.permute.xlu0 %547
    %550 = vset.pattern.permute.xlu0 9
    %551 = vperm.xlu0 %550, %v35
    %v552 = vpop.permute.xlu0 %551
    %554 = vset.pattern.permute.xlu0 9
    %555 = vperm.xlu0 %554, %v36
    %v556 = vpop.permute.xlu0 %555
    %558 = vset.pattern.permute.xlu0 9
    %559 = vperm.xlu0 %558, %v37
    %v560 = vpop.permute.xlu0 %559
    %562 = vset.pattern.permute.xlu0 9
    %563 = vperm.xlu0 %562, %v38
    %v564 = vpop.permute.xlu0 %563
    %566 = vset.pattern.permute.xlu0 9
    %567 = vperm.xlu0 %566, %v39
    %v568 = vpop.permute.xlu0 %567
    %570 = vset.pattern.permute.xlu0 9
    %571 = vperm.xlu0 %570, %v40
    %v572 = vpop.permute.xlu0 %571
    %574 = vset.pattern.permute.xlu0 9
    %575 = vperm.xlu0 %574, %v41
    %v576 = vpop.permute.xlu0 %575
    %578 = vset.pattern.permute.xlu0 9
    %579 = vperm.xlu0 %578, %v42
    %v580 = vpop.permute.xlu0 %579
    %582 = vset.pattern.permute.xlu0 9
    %583 = vperm.xlu0 %582, %v43
    %v584 = vpop.permute.xlu0 %583
    %586 = vset.pattern.permute.xlu0 9
    %587 = vperm.xlu0 %586, %v44
    %v588 = vpop.permute.xlu0 %587
    %v590 = vmul.f32 %v528, %v510
    %v591 = vmul.f32 %v532, %v511
    %v592 = vmul.f32 %v536, %v512
    %v593 = vmul.f32 %v540, %v513
    %v594 = vmul.f32 %v544, %v514
    %v595 = vmul.f32 %v548, %v515
    %v596 = vmul.f32 %v552, %v516
    %v597 = vmul.f32 %v556, %v517
    %v598 = vmul.f32 %v560, %v518
    %v599 = vmul.f32 %v564, %v519
    %v600 = vmul.f32 %v568, %v520
    %v601 = vmul.f32 %v572, %v521
    %v602 = vmul.f32 %v576, %v522
    %v603 = vmul.f32 %v580, %v523
    %v604 = vmul.f32 %v584, %v524
    %v605 = vmul.f32 %v588, %v525
    %v606 = vadd.f32 %v590, %v591
    %v607 = vadd.f32 %v606, %v592
    %v608 = vadd.f32 %v607, %v593
    %v609 = vadd.f32 %v608, %v594
    %v610 = vadd.f32 %v609, %v595
    %v611 = vadd.f32 %v610, %v596
    %v612 = vadd.f32 %v611, %v597
    %v613 = vadd.f32 %v612, %v598
    %v614 = vadd.f32 %v613, %v599
    %v615 = vadd.f32 %v614, %v600
    %v616 = vadd.f32 %v615, %v601
    %v617 = vadd.f32 %v616, %v602
    %v618 = vadd.f32 %v617, %v603
    %v619 = vadd.f32 %v618, %v604
    %v620 = vadd.f32 %v619, %v605
    %v621 = vrot.slane %v620, 4
    %v622 = vadd.f32 %v620, %v621
    %v623 = vrot.slane %v622, 2
    %v624 = vadd.f32 %v622, %v623
    %v625 = vrot.slane %v624, 1
    %v626 = vadd.f32 %v624, %v625
    %s627 = sld [smem:[#allocation2 + $0xd]]
    %v628 = vstv %s627
    %v629 = vadd.f32 %v626, %v628
    %v630 = vld [vmem:[%s0 + $0x2] sm:$0x1]
    %v631 = vlaneseq
    %v632 = vshrl.u32 %v631, 7
    %v633 = vsub.s32 0, %v632
    %v634 = vrot.slane %v630, %v633
    %635 = vset.pattern.permute.xlu0 6
    %636 = vperm.xlu0 %635, %v29
    %v637 = vpop.permute.xlu0 %636
    %639 = vset.pattern.permute.xlu0 6
    %640 = vperm.xlu0 %639, %v30
    %v641 = vpop.permute.xlu0 %640
    %643 = vset.pattern.permute.xlu0 6
    %644 = vperm.xlu0 %643, %v31
    %v645 = vpop.permute.xlu0 %644
    %647 = vset.pattern.permute.xlu0 6
    %648 = vperm.xlu0 %647, %v32
    %v649 = vpop.permute.xlu0 %648
    %651 = vset.pattern.permute.xlu0 6
    %652 = vperm.xlu0 %651, %v33
    %v653 = vpop.permute.xlu0 %652
    %655 = vset.pattern.permute.xlu0 6
    %656 = vperm.xlu0 %655, %v34
    %v657 = vpop.permute.xlu0 %656
    %659 = vset.pattern.permute.xlu0 6
    %660 = vperm.xlu0 %659, %v35
    %v661 = vpop.permute.xlu0 %660
    %663 = vset.pattern.permute.xlu0 6
    %664 = vperm.xlu0 %663, %v36
    %v665 = vpop.permute.xlu0 %664
    %667 = vset.pattern.permute.xlu0 6
    %668 = vperm.xlu0 %667, %v37
    %v669 = vpop.permute.xlu0 %668
    %671 = vset.pattern.permute.xlu0 6
    %672 = vperm.xlu0 %671, %v38
    %v673 = vpop.permute.xlu0 %672
    %675 = vset.pattern.permute.xlu0 6
    %676 = vperm.xlu0 %675, %v39
    %v677 = vpop.permute.xlu0 %676
    %679 = vset.pattern.permute.xlu0 6
    %680 = vperm.xlu0 %679, %v40
    %v681 = vpop.permute.xlu0 %680
    %683 = vset.pattern.permute.xlu0 6
    %684 = vperm.xlu0 %683, %v41
    %v685 = vpop.permute.xlu0 %684
    %687 = vset.pattern.permute.xlu0 6
    %688 = vperm.xlu0 %687, %v42
    %v689 = vpop.permute.xlu0 %688
    %691 = vset.pattern.permute.xlu0 6
    %692 = vperm.xlu0 %691, %v43
    %v693 = vpop.permute.xlu0 %692
    %695 = vset.pattern.permute.xlu0 6
    %696 = vperm.xlu0 %695, %v44
    %v697 = vpop.permute.xlu0 %696
    %v699 = vsub.f32 %v634, %v637
    %v700 = vsub.f32 %v634, %v641
    %v701 = vsub.f32 %v634, %v645
    %v702 = vsub.f32 %v634, %v649
    %v703 = vsub.f32 %v634, %v653
    %v704 = vsub.f32 %v634, %v657
    %v705 = vsub.f32 %v634, %v661
    %v706 = vsub.f32 %v634, %v665
    %v707 = vsub.f32 %v634, %v669
    %v708 = vsub.f32 %v634, %v673
    %v709 = vsub.f32 %v634, %v677
    %v710 = vsub.f32 %v634, %v681
    %v711 = vsub.f32 %v634, %v685
    %v712 = vsub.f32 %v634, %v689
    %v713 = vsub.f32 %v634, %v693
    %v714 = vsub.f32 %v634, %v697
    %715 = vset.pattern.permute.xlu0 2
    %716 = vperm.xlu0 %715, %v29
    %v717 = vpop.permute.xlu0 %716
    %719 = vset.pattern.permute.xlu0 2
    %720 = vperm.xlu0 %719, %v30
    %v721 = vpop.permute.xlu0 %720
    %723 = vset.pattern.permute.xlu0 2
    %724 = vperm.xlu0 %723, %v31
    %v725 = vpop.permute.xlu0 %724
    %727 = vset.pattern.permute.xlu0 2
    %728 = vperm.xlu0 %727, %v32
    %v729 = vpop.permute.xlu0 %728
    %731 = vset.pattern.permute.xlu0 2
    %732 = vperm.xlu0 %731, %v33
    %v733 = vpop.permute.xlu0 %732
    %735 = vset.pattern.permute.xlu0 2
    %736 = vperm.xlu0 %735, %v34
    %v737 = vpop.permute.xlu0 %736
    %739 = vset.pattern.permute.xlu0 2
    %740 = vperm.xlu0 %739, %v35
    %v741 = vpop.permute.xlu0 %740
    %743 = vset.pattern.permute.xlu0 2
    %744 = vperm.xlu0 %743, %v36
    %v745 = vpop.permute.xlu0 %744
    %747 = vset.pattern.permute.xlu0 2
    %748 = vperm.xlu0 %747, %v37
    %v749 = vpop.permute.xlu0 %748
    %751 = vset.pattern.permute.xlu0 2
    %752 = vperm.xlu0 %751, %v38
    %v753 = vpop.permute.xlu0 %752
    %755 = vset.pattern.permute.xlu0 2
    %756 = vperm.xlu0 %755, %v39
    %v757 = vpop.permute.xlu0 %756
    %759 = vset.pattern.permute.xlu0 2
    %760 = vperm.xlu0 %759, %v40
    %v761 = vpop.permute.xlu0 %760
    %763 = vset.pattern.permute.xlu0 2
    %764 = vperm.xlu0 %763, %v41
    %v765 = vpop.permute.xlu0 %764
    %767 = vset.pattern.permute.xlu0 2
    %768 = vperm.xlu0 %767, %v42
    %v769 = vpop.permute.xlu0 %768
    %771 = vset.pattern.permute.xlu0 2
    %772 = vperm.xlu0 %771, %v43
    %v773 = vpop.permute.xlu0 %772
    %775 = vset.pattern.permute.xlu0 2
    %776 = vperm.xlu0 %775, %v44
    %v777 = vpop.permute.xlu0 %776
    %v779 = vmul.f32 %v717, %v699
    %v780 = vmul.f32 %v721, %v700
    %v781 = vmul.f32 %v725, %v701
    %v782 = vmul.f32 %v729, %v702
    %v783 = vmul.f32 %v733, %v703
    %v784 = vmul.f32 %v737, %v704
    %v785 = vmul.f32 %v741, %v705
    %v786 = vmul.f32 %v745, %v706
    %v787 = vmul.f32 %v749, %v707
    %v788 = vmul.f32 %v753, %v708
    %v789 = vmul.f32 %v757, %v709
    %v790 = vmul.f32 %v761, %v710
    %v791 = vmul.f32 %v765, %v711
    %v792 = vmul.f32 %v769, %v712
    %v793 = vmul.f32 %v773, %v713
    %v794 = vmul.f32 %v777, %v714
    %v795 = vtanh.pop %v779
    %v796 = vtanh.pop %v780
    %v797 = vtanh.pop %v781
    %v798 = vtanh.pop %v782
    %v799 = vtanh.pop %v783
    %v800 = vtanh.pop %v784
    %v801 = vtanh.pop %v785
    %v802 = vtanh.pop %v786
    %v803 = vtanh.pop %v787
    %v804 = vtanh.pop %v788
    %v805 = vtanh.pop %v789
    %v806 = vtanh.pop %v790
    %v807 = vtanh.pop %v791
    %v808 = vtanh.pop %v792
    %v809 = vtanh.pop %v793
    %v810 = vtanh.pop %v794
    %811 = vset.pattern.permute.xlu0 10
    %812 = vperm.xlu0 %811, %v29
    %v813 = vpop.permute.xlu0 %812
    %815 = vset.pattern.permute.xlu0 10
    %816 = vperm.xlu0 %815, %v30
    %v817 = vpop.permute.xlu0 %816
    %819 = vset.pattern.permute.xlu0 10
    %820 = vperm.xlu0 %819, %v31
    %v821 = vpop.permute.xlu0 %820
    %823 = vset.pattern.permute.xlu0 10
    %824 = vperm.xlu0 %823, %v32
    %v825 = vpop.permute.xlu0 %824
    %827 = vset.pattern.permute.xlu0 10
    %828 = vperm.xlu0 %827, %v33
    %v829 = vpop.permute.xlu0 %828
    %831 = vset.pattern.permute.xlu0 10
    %832 = vperm.xlu0 %831, %v34
    %v833 = vpop.permute.xlu0 %832
    %835 = vset.pattern.permute.xlu0 10
    %836 = vperm.xlu0 %835, %v35
    %v837 = vpop.permute.xlu0 %836
    %839 = vset.pattern.permute.xlu0 10
    %840 = vperm.xlu0 %839, %v36
    %v841 = vpop.permute.xlu0 %840
    %843 = vset.pattern.permute.xlu0 10
    %844 = vperm.xlu0 %843, %v37
    %v845 = vpop.permute.xlu0 %844
    %847 = vset.pattern.permute.xlu0 10
    %848 = vperm.xlu0 %847, %v38
    %v849 = vpop.permute.xlu0 %848
    %851 = vset.pattern.permute.xlu0 10
    %852 = vperm.xlu0 %851, %v39
    %v853 = vpop.permute.xlu0 %852
    %855 = vset.pattern.permute.xlu0 10
    %856 = vperm.xlu0 %855, %v40
    %v857 = vpop.permute.xlu0 %856
    %859 = vset.pattern.permute.xlu0 10
    %860 = vperm.xlu0 %859, %v41
    %v861 = vpop.permute.xlu0 %860
    %863 = vset.pattern.permute.xlu0 10
    %864 = vperm.xlu0 %863, %v42
    %v865 = vpop.permute.xlu0 %864
    %867 = vset.pattern.permute.xlu0 10
    %868 = vperm.xlu0 %867, %v43
    %v869 = vpop.permute.xlu0 %868
    %871 = vset.pattern.permute.xlu0 10
    %872 = vperm.xlu0 %871, %v44
    %v873 = vpop.permute.xlu0 %872
    %v875 = vmul.f32 %v813, %v795
    %v876 = vmul.f32 %v817, %v796
    %v877 = vmul.f32 %v821, %v797
    %v878 = vmul.f32 %v825, %v798
    %v879 = vmul.f32 %v829, %v799
    %v880 = vmul.f32 %v833, %v800
    %v881 = vmul.f32 %v837, %v801
    %v882 = vmul.f32 %v841, %v802
    %v883 = vmul.f32 %v845, %v803
    %v884 = vmul.f32 %v849, %v804
    %v885 = vmul.f32 %v853, %v805
    %v886 = vmul.f32 %v857, %v806
    %v887 = vmul.f32 %v861, %v807
    %v888 = vmul.f32 %v865, %v808
    %v889 = vmul.f32 %v869, %v809
    %v890 = vmul.f32 %v873, %v810
    %v891 = vadd.f32 %v875, %v876
    %v892 = vadd.f32 %v891, %v877
    %v893 = vadd.f32 %v892, %v878
    %v894 = vadd.f32 %v893, %v879
    %v895 = vadd.f32 %v894, %v880
    %v896 = vadd.f32 %v895, %v881
    %v897 = vadd.f32 %v896, %v882
    %v898 = vadd.f32 %v897, %v883
    %v899 = vadd.f32 %v898, %v884
    %v900 = vadd.f32 %v899, %v885
    %v901 = vadd.f32 %v900, %v886
    %v902 = vadd.f32 %v901, %v887
    %v903 = vadd.f32 %v902, %v888
    %v904 = vadd.f32 %v903, %v889
    %v905 = vadd.f32 %v904, %v890
    %v906 = vrot.slane %v905, 4
    %v907 = vadd.f32 %v905, %v906
    %v908 = vrot.slane %v907, 2
    %v909 = vadd.f32 %v907, %v908
    %v910 = vrot.slane %v909, 1
    %v911 = vadd.f32 %v909, %v910
    %s912 = sld [smem:[#allocation2 + $0xe]]
    %v913 = vstv %s912
    %v914 = vadd.f32 %v911, %v913
    %v915 = vld [vmem:[%s0 + $0x3] sm:$0x1]
    %v916 = vlaneseq
    %v917 = vshrl.u32 %v916, 7
    %v918 = vsub.s32 0, %v917
    %v919 = vrot.slane %v915, %v918
    %920 = vset.pattern.permute.xlu0 7
    %921 = vperm.xlu0 %920, %v29
    %v922 = vpop.permute.xlu0 %921
    %924 = vset.pattern.permute.xlu0 7
    %925 = vperm.xlu0 %924, %v30
    %v926 = vpop.permute.xlu0 %925
    %928 = vset.pattern.permute.xlu0 7
    %929 = vperm.xlu0 %928, %v31
    %v930 = vpop.permute.xlu0 %929
    %932 = vset.pattern.permute.xlu0 7
    %933 = vperm.xlu0 %932, %v32
    %v934 = vpop.permute.xlu0 %933
    %936 = vset.pattern.permute.xlu0 7
    %937 = vperm.xlu0 %936, %v33
    %v938 = vpop.permute.xlu0 %937
    %940 = vset.pattern.permute.xlu0 7
    %941 = vperm.xlu0 %940, %v34
    %v942 = vpop.permute.xlu0 %941
    %944 = vset.pattern.permute.xlu0 7
    %945 = vperm.xlu0 %944, %v35
    %v946 = vpop.permute.xlu0 %945
    %948 = vset.pattern.permute.xlu0 7
    %949 = vperm.xlu0 %948, %v36
    %v950 = vpop.permute.xlu0 %949
    %952 = vset.pattern.permute.xlu0 7
    %953 = vperm.xlu0 %952, %v37
    %v954 = vpop.permute.xlu0 %953
    %956 = vset.pattern.permute.xlu0 7
    %957 = vperm.xlu0 %956, %v38
    %v958 = vpop.permute.xlu0 %957
    %960 = vset.pattern.permute.xlu0 7
    %961 = vperm.xlu0 %960, %v39
    %v962 = vpop.permute.xlu0 %961
    %964 = vset.pattern.permute.xlu0 7
    %965 = vperm.xlu0 %964, %v40
    %v966 = vpop.permute.xlu0 %965
    %968 = vset.pattern.permute.xlu0 7
    %969 = vperm.xlu0 %968, %v41
    %v970 = vpop.permute.xlu0 %969
    %972 = vset.pattern.permute.xlu0 7
    %973 = vperm.xlu0 %972, %v42
    %v974 = vpop.permute.xlu0 %973
    %976 = vset.pattern.permute.xlu0 7
    %977 = vperm.xlu0 %976, %v43
    %v978 = vpop.permute.xlu0 %977
    %980 = vset.pattern.permute.xlu0 7
    %981 = vperm.xlu0 %980, %v44
    %v982 = vpop.permute.xlu0 %981
    %v984 = vsub.f32 %v919, %v922
    %v985 = vsub.f32 %v919, %v926
    %v986 = vsub.f32 %v919, %v930
    %v987 = vsub.f32 %v919, %v934
    %v988 = vsub.f32 %v919, %v938
    %v989 = vsub.f32 %v919, %v942
    %v990 = vsub.f32 %v919, %v946
    %v991 = vsub.f32 %v919, %v950
    %v992 = vsub.f32 %v919, %v954
    %v993 = vsub.f32 %v919, %v958
    %v994 = vsub.f32 %v919, %v962
    %v995 = vsub.f32 %v919, %v966
    %v996 = vsub.f32 %v919, %v970
    %v997 = vsub.f32 %v919, %v974
    %v998 = vsub.f32 %v919, %v978
    %v999 = vsub.f32 %v919, %v982
    %1000 = vset.pattern.permute.xlu0 3
    %1001 = vperm.xlu0 %1000, %v29
    %v1002 = vpop.permute.xlu0 %1001
    %1004 = vset.pattern.permute.xlu0 3
    %1005 = vperm.xlu0 %1004, %v30
    %v1006 = vpop.permute.xlu0 %1005
    %1008 = vset.pattern.permute.xlu0 3
    %1009 = vperm.xlu0 %1008, %v31
    %v1010 = vpop.permute.xlu0 %1009
    %1012 = vset.pattern.permute.xlu0 3
    %1013 = vperm.xlu0 %1012, %v32
    %v1014 = vpop.permute.xlu0 %1013
    %1016 = vset.pattern.permute.xlu0 3
    %1017 = vperm.xlu0 %1016, %v33
    %v1018 = vpop.permute.xlu0 %1017
    %1020 = vset.pattern.permute.xlu0 3
    %1021 = vperm.xlu0 %1020, %v34
    %v1022 = vpop.permute.xlu0 %1021
    %1024 = vset.pattern.permute.xlu0 3
    %1025 = vperm.xlu0 %1024, %v35
    %v1026 = vpop.permute.xlu0 %1025
    %1028 = vset.pattern.permute.xlu0 3
    %1029 = vperm.xlu0 %1028, %v36
    %v1030 = vpop.permute.xlu0 %1029
    %1032 = vset.pattern.permute.xlu0 3
    %1033 = vperm.xlu0 %1032, %v37
    %v1034 = vpop.permute.xlu0 %1033
    %1036 = vset.pattern.permute.xlu0 3
    %1037 = vperm.xlu0 %1036, %v38
    %v1038 = vpop.permute.xlu0 %1037
    %1040 = vset.pattern.permute.xlu0 3
    %1041 = vperm.xlu0 %1040, %v39
    %v1042 = vpop.permute.xlu0 %1041
    %1044 = vset.pattern.permute.xlu0 3
    %1045 = vperm.xlu0 %1044, %v40
    %v1046 = vpop.permute.xlu0 %1045
    %1048 = vset.pattern.permute.xlu0 3
    %1049 = vperm.xlu0 %1048, %v41
    %v1050 = vpop.permute.xlu0 %1049
    %1052 = vset.pattern.permute.xlu0 3
    %1053 = vperm.xlu0 %1052, %v42
    %v1054 = vpop.permute.xlu0 %1053
    %1056 = vset.pattern.permute.xlu0 3
    %1057 = vperm.xlu0 %1056, %v43
    %v1058 = vpop.permute.xlu0 %1057
    %1060 = vset.pattern.permute.xlu0 3
    %1061 = vperm.xlu0 %1060, %v44
    %v1062 = vpop.permute.xlu0 %1061
    %v1064 = vmul.f32 %v1002, %v984
    %v1065 = vmul.f32 %v1006, %v985
    %v1066 = vmul.f32 %v1010, %v986
    %v1067 = vmul.f32 %v1014, %v987
    %v1068 = vmul.f32 %v1018, %v988
    %v1069 = vmul.f32 %v1022, %v989
    %v1070 = vmul.f32 %v1026, %v990
    %v1071 = vmul.f32 %v1030, %v991
    %v1072 = vmul.f32 %v1034, %v992
    %v1073 = vmul.f32 %v1038, %v993
    %v1074 = vmul.f32 %v1042, %v994
    %v1075 = vmul.f32 %v1046, %v995
    %v1076 = vmul.f32 %v1050, %v996
    %v1077 = vmul.f32 %v1054, %v997
    %v1078 = vmul.f32 %v1058, %v998
    %v1079 = vmul.f32 %v1062, %v999
    %v1080 = vtanh.pop %v1064
    %v1081 = vtanh.pop %v1065
    %v1082 = vtanh.pop %v1066
    %v1083 = vtanh.pop %v1067
    %v1084 = vtanh.pop %v1068
    %v1085 = vtanh.pop %v1069
    %v1086 = vtanh.pop %v1070
    %v1087 = vtanh.pop %v1071
    %v1088 = vtanh.pop %v1072
    %v1089 = vtanh.pop %v1073
    %v1090 = vtanh.pop %v1074
    %v1091 = vtanh.pop %v1075
    %v1092 = vtanh.pop %v1076
    %v1093 = vtanh.pop %v1077
    %v1094 = vtanh.pop %v1078
    %v1095 = vtanh.pop %v1079
    %1096 = vset.pattern.permute.xlu0 11
    %1097 = vperm.xlu0 %1096, %v29
    %v1098 = vpop.permute.xlu0 %1097
    %1100 = vset.pattern.permute.xlu0 11
    %1101 = vperm.xlu0 %1100, %v30
    %v1102 = vpop.permute.xlu0 %1101
    %1104 = vset.pattern.permute.xlu0 11
    %1105 = vperm.xlu0 %1104, %v31
    %v1106 = vpop.permute.xlu0 %1105
    %1108 = vset.pattern.permute.xlu0 11
    %1109 = vperm.xlu0 %1108, %v32
    %v1110 = vpop.permute.xlu0 %1109
    %1112 = vset.pattern.permute.xlu0 11
    %1113 = vperm.xlu0 %1112, %v33
    %v1114 = vpop.permute.xlu0 %1113
    %1116 = vset.pattern.permute.xlu0 11
    %1117 = vperm.xlu0 %1116, %v34
    %v1118 = vpop.permute.xlu0 %1117
    %1120 = vset.pattern.permute.xlu0 11
    %1121 = vperm.xlu0 %1120, %v35
    %v1122 = vpop.permute.xlu0 %1121
    %1124 = vset.pattern.permute.xlu0 11
    %1125 = vperm.xlu0 %1124, %v36
    %v1126 = vpop.permute.xlu0 %1125
    %1128 = vset.pattern.permute.xlu0 11
    %1129 = vperm.xlu0 %1128, %v37
    %v1130 = vpop.permute.xlu0 %1129
    %1132 = vset.pattern.permute.xlu0 11
    %1133 = vperm.xlu0 %1132, %v38
    %v1134 = vpop.permute.xlu0 %1133
    %1136 = vset.pattern.permute.xlu0 11
    %1137 = vperm.xlu0 %1136, %v39
    %v1138 = vpop.permute.xlu0 %1137
    %1140 = vset.pattern.permute.xlu0 11
    %1141 = vperm.xlu0 %1140, %v40
    %v1142 = vpop.permute.xlu0 %1141
    %1144 = vset.pattern.permute.xlu0 11
    %1145 = vperm.xlu0 %1144, %v41
    %v1146 = vpop.permute.xlu0 %1145
    %1148 = vset.pattern.permute.xlu0 11
    %1149 = vperm.xlu0 %1148, %v42
    %v1150 = vpop.permute.xlu0 %1149
    %1152 = vset.pattern.permute.xlu0 11
    %1153 = vperm.xlu0 %1152, %v43
    %v1154 = vpop.permute.xlu0 %1153
    %1156 = vset.pattern.permute.xlu0 11
    %1157 = vperm.xlu0 %1156, %v44
    %v1158 = vpop.permute.xlu0 %1157
    %v1160 = vmul.f32 %v1098, %v1080
    %v1161 = vmul.f32 %v1102, %v1081
    %v1162 = vmul.f32 %v1106, %v1082
    %v1163 = vmul.f32 %v1110, %v1083
    %v1164 = vmul.f32 %v1114, %v1084
    %v1165 = vmul.f32 %v1118, %v1085
    %v1166 = vmul.f32 %v1122, %v1086
    %v1167 = vmul.f32 %v1126, %v1087
    %v1168 = vmul.f32 %v1130, %v1088
    %v1169 = vmul.f32 %v1134, %v1089
    %v1170 = vmul.f32 %v1138, %v1090
    %v1171 = vmul.f32 %v1142, %v1091
    %v1172 = vmul.f32 %v1146, %v1092
    %v1173 = vmul.f32 %v1150, %v1093
    %v1174 = vmul.f32 %v1154, %v1094
    %v1175 = vmul.f32 %v1158, %v1095
    %v1176 = vadd.f32 %v1160, %v1161
    %v1177 = vadd.f32 %v1176, %v1162
    %v1178 = vadd.f32 %v1177, %v1163
    %v1179 = vadd.f32 %v1178, %v1164
    %v1180 = vadd.f32 %v1179, %v1165
    %v1181 = vadd.f32 %v1180, %v1166
    %v1182 = vadd.f32 %v1181, %v1167
    %v1183 = vadd.f32 %v1182, %v1168
    %v1184 = vadd.f32 %v1183, %v1169
    %v1185 = vadd.f32 %v1184, %v1170
    %v1186 = vadd.f32 %v1185, %v1171
    %v1187 = vadd.f32 %v1186, %v1172
    %v1188 = vadd.f32 %v1187, %v1173
    %v1189 = vadd.f32 %v1188, %v1174
    %v1190 = vadd.f32 %v1189, %v1175
    %v1191 = vrot.slane %v1190, 4
    %v1192 = vadd.f32 %v1190, %v1191
    %v1193 = vrot.slane %v1192, 2
    %v1194 = vadd.f32 %v1192, %v1193
    %v1195 = vrot.slane %v1194, 1
    %v1196 = vadd.f32 %v1194, %v1195
    %s1197 = sld [smem:[#allocation2 + $0xf]]
    %v1198 = vstv %s1197
    %v1199 = vadd.f32 %v1196, %v1198
    %s1200 = sld [smem:[#allocation2]]
    %v1201 = vstv %s1200
    %v1202 = vmul.f32 %v1201, %v344
    %s1203 = sld [smem:[#allocation2 + $0x1]]
    %v1204 = vstv %s1203
    %v1205 = vmul.f32 %v1204, %v629
    %v1206 = vadd.f32 %v1202, %v1205
    %s1207 = sld [smem:[#allocation2 + $0x6]]
    %v1208 = vmin.f32 %v344, %v629
    %v1209 = vstv %s1207
    %v1210 = vmul.f32 %v1209, %v1208
    %v1211 = vadd.f32 %v1206, %v1210
    %s1212 = sld [smem:[#allocation2 + $0x9]]
    %v1213 = vmax.f32 %v344, %v629
    %v1214 = vstv %s1212
    %v1215 = vmul.f32 %v1214, %v1213
    %v1216 = vadd.f32 %v1211, %v1215
    %s1217 = sld [smem:[#allocation2 + $0x2]]
    %v1218 = vstv %s1217
    %v1219 = vmul.f32 %v1218, %v914
    %s1220 = sld [smem:[#allocation2 + $0x3]]
    %v1221 = vstv %s1220
    %v1222 = vmul.f32 %v1221, %v1199
    %v1223 = vadd.f32 %v1219, %v1222
    %s1224 = sld [smem:[#allocation2 + $0x7]]
    %v1225 = vmin.f32 %v914, %v1199
    %v1226 = vstv %s1224
    %v1227 = vmul.f32 %v1226, %v1225
    %v1228 = vadd.f32 %v1223, %v1227
    %s1229 = sld [smem:[#allocation2 + $0xa]]
    %v1230 = vmax.f32 %v914, %v1199
    %v1231 = vstv %s1229
    %v1232 = vmul.f32 %v1231, %v1230
    %v1233 = vadd.f32 %v1228, %v1232
    %s1234 = sld [smem:[#allocation2 + $0x4]]
    %v1235 = vstv %s1234
    %v1236 = vmul.f32 %v1235, %v1216
    %s1237 = sld [smem:[#allocation2 + $0x5]]
    %v1238 = vstv %s1237
    %v1239 = vmul.f32 %v1238, %v1233
    %v1240 = vadd.f32 %v1236, %v1239
    %s1241 = sld [smem:[#allocation2 + $0x8]]
    %v1242 = vmin.f32 %v1216, %v1233
    %v1243 = vstv %s1241
    %v1244 = vmul.f32 %v1243, %v1242
    %v1245 = vadd.f32 %v1240, %v1244
    %s1246 = sld [smem:[#allocation2 + $0xb]]
    %v1247 = vmax.f32 %v1216, %v1233
    %v1248 = vstv %s1246
    %v1249 = vmul.f32 %v1248, %v1247
    %v1250 = vadd.f32 %v1245, %v1249
    %1251 = vst [vmem:[#allocation5] sm:$0x1] %v1250
    // Predicated region
    $region18: #{tpu_custom_call.1} parent=1 // pred_check
      _
    $region19: #{tpu_custom_call.1} parent=1 // pred_check_branch
      %1253 = sbr.rel (0) target = $region21
    $region20: #{tpu_custom_call.1} parent=1 // pred_region
      %s1255 = ssub.s32 16, 16
      %1256 = vsyncadd [#allocation3], %s1255
      %s1258 = sshll.u32 [#allocation5], 4
      %s1259 = int_to_ptr.vmem [resolvable:$true] %s1258
      %1261 = dma.vmem_to_hbm [thread:$0]  %s1259, 16, %s3, [#allocation3]
    $region21: #{tpu_custom_call.1} parent=1 // pred_fallthru
      _
    // Predicated region
    $region22: #{tpu_custom_call.1} parent=1 // pred_check
      _
    $region23: #{tpu_custom_call.1} parent=1 // pred_check_branch
      %1263 = sbr.rel (0) target = $region25
    $region24: #{tpu_custom_call.1} parent=1 // pred_region
      %1264 = dma.done [#allocation3], 16
    $region25: #{tpu_custom_call.1} parent=1 // pred_fallthru
      _
    %1265 = vsyncpa [#allocation3], 1
    %1266 = vsyncpa [#allocation4], 1

</llo_original>
